<compile_context>
chip_gen: v6e
topology: v6e:2x2x1
jax: 0.10.0
libtpu: 0.0.40
codegen_flags: <defaults>
</compile_context>

<pallas_src>
import functools

import jax
import jax.numpy as jnp
from jax.experimental import pallas as pl
from jax.experimental.pallas import tpu as pltpu

_LANE = 128


def _round_up(x, m):
    return ((x + m - 1) // m) * m


def _vmem_caps():
    """Returns (per-kernel input-tile budget, requested scoped VMEM limit)."""
    cap = 64 * 1024 * 1024            # conservative default (v7x physical VMEM)
    try:
        cap = int(pltpu.get_tpu_info().vmem_capacity_bytes)
    except Exception:
        pass
    budget = max(4 * 1024 * 1024, min(20 * 1024 * 1024, cap // 4))
    limit = int(min(64 * 1024 * 1024, max(32 * 1024 * 1024, cap // 2)))
    return budget, limit


def _dice_kernel(pred_ref, tgt_ref, inter_ref, union_ref, *, n_classes, needs_mask):
    """Accumulates per-(batch, chunk, class) intersection / union partial sums.

    pred_ref : (1, C, R, 128) logits block (input dtype)
    tgt_ref  : (1, R, 128)    integer label block (-1 marks padded positions)
    inter_ref / union_ref : (1, 1, C, 128) f32 output blocks, resident across
        the inner (arbitrary) spatial axis -> used directly as accumulators.
    """
    i = pl.program_id(2)

    @pl.when(i == 0)
    def _():
        inter_ref[...] = jnp.zeros_like(inter_ref)
        union_ref[...] = jnp.zeros_like(union_ref)

    pred = pred_ref[0].astype(jnp.float32)            # (C, R, 128)
    tgt = tgt_ref[0].astype(jnp.int32)                # (R, 128)

    # Softmax over the class axis (class = leading slabs -> pure VPU/EUP work).
    m = jnp.max(pred, axis=0, keepdims=True)          # (1, R, 128)
    e = jnp.exp(pred - m)                             # (C, R, 128)  (EUP)
    denom = jnp.sum(e, axis=0, keepdims=True)         # (1, R, 128)

    # Approx reciprocal (EUP slot) + one Newton refinement instead of an exact
    # VALU divide; denom >= 1 so this is well conditioned (~1e-8 rel error).
    r = pl.reciprocal(denom, approx=True)
    inv = r * (2.0 - denom * r)

    if needs_mask:
        # Padded positions carry tgt == -1.  Folding the validity mask into the
        # shared reciprocal zeros sm (hence sm*oh and sm*sm) with a single
        # 1/C-sized multiply.
        inv = inv * (tgt >= 0).astype(jnp.float32)[None]

    sm = e * inv                                      # (C, R, 128)
    # One-hot via per-class compares against immediate constants (no big iota).
    oh = jnp.stack([tgt == c for c in range(n_classes)], axis=0).astype(jnp.float32)

    # Reduce over rows (sublanes) before accumulating so the resident
    # accumulator (= the output block) is only (C, 128) f32 per (b, chunk).
    inter_part = jnp.sum(sm * oh, axis=1)             # (C, 128)
    union_part = jnp.sum(sm * sm + oh, axis=1)        # (C, 128); oh**2 == oh

    inter_ref[0, 0] = inter_ref[0, 0] + inter_part
    union_ref[0, 0] = union_ref[0, 0] + union_part


def multilabel_dice_loss(predictions, targets, n_classes=2):
    """predictions: (B, C, H, W) float; targets: (B, H, W) or (B, 1, H, W) int."""
    B, C, H, W = predictions.shape
    assert n_classes == C, "n_classes must match the prediction channel dim"
    if targets.ndim == 4:
        targets = jnp.squeeze(targets, axis=1)

    S = H * W
    rows = pl.cdiv(S, _LANE)

    # --- spatial tile selection (generation-aware VMEM budget) --------------
    budget, vmem_limit = _vmem_caps()
    pred_bytes = predictions.dtype.itemsize
    # Double-buffered input tiles + allowance for in-body f32 temporaries
    # (pred_f32 / e / sm / oh / products).
    per_row = 2 * (C * _LANE * pred_bytes + _LANE * 4) + 6 * C * _LANE * 4
    cap_rows = max(8, min(1024, (budget // per_row) // 8 * 8))

    if rows <= cap_rows:
        # Whole spatial extent in one tile: zero row padding.
        r_tile = rows
        rows_p = rows
    else:
        # Largest multiple-of-8 tile <= cap_rows minimizing row padding.
        best_key, r_tile = None, 8
        for cand in range(8, cap_rows + 1, 8):
            key = ((-rows) % cand, -cand)
            if best_key is None or key < best_key:
                best_key, r_tile = key, cand
        rows_p = _round_up(rows, r_tile)

    s_pad = rows_p * _LANE
    needs_mask = (s_pad != S)
    n_s = rows_p // r_tile

    # --- targets: keep narrow integer dtypes, widen inside the kernel -------
    if not jnp.issubdtype(targets.dtype, jnp.signedinteger):
        if needs_mask or not jnp.issubdtype(targets.dtype, jnp.integer):
            # Need the -1 pad sentinel (or had float/bool labels).
            targets = targets.astype(jnp.int32)

    pred = predictions.reshape(B, C, S)
    tgt = targets.reshape(B, S)
    if needs_mask:
        pred = jnp.pad(pred, ((0, 0), (0, 0), (0, s_pad - S)))
        tgt = jnp.pad(tgt, ((0, 0), (0, s_pad - S)), constant_values=-1)
    pred = pred.reshape(B, C, rows_p, _LANE)
    tgt = tgt.reshape(B, rows_p, _LANE)

    # --- megacore-friendly spatial split (helps v7x at small / odd B) -------
    n_outer = 2 if (B % 2 == 1 and n_s % 2 == 0) else 1
    n_inner = n_s // n_outer

    kernel = functools.partial(_dice_kernel, n_classes=C, needs_mask=needs_mask)

    inter_out, union_out = pl.pallas_call(
        kernel,
        out_shape=(
            jax.ShapeDtypeStruct((B, n_outer, C, _LANE), jnp.float32),
            jax.ShapeDtypeStruct((B, n_outer, C, _LANE), jnp.float32),
        ),
        grid_spec=pltpu.PrefetchScalarGridSpec(
            num_scalar_prefetch=0,
            grid=(B, n_outer, n_inner),
            in_specs=[
                pl.BlockSpec((1, C, r_tile, _LANE),
                             lambda b, o, i: (b, 0, o * n_inner + i, 0)),
                pl.BlockSpec((1, r_tile, _LANE),
                             lambda b, o, i: (b, o * n_inner + i, 0)),
            ],
            out_specs=[
                pl.BlockSpec((1, 1, C, _LANE), lambda b, o, i: (b, o, 0, 0)),
                pl.BlockSpec((1, 1, C, _LANE), lambda b, o, i: (b, o, 0, 0)),
            ],
        ),
        compiler_params=pltpu.CompilerParams(
            dimension_semantics=("parallel", "parallel", "arbitrary"),
            vmem_limit_bytes=vmem_limit,
        ),
    )(pred, tgt)

    # Finalize (tiny): cross-lane + chunk reduction, dice ratio, batch mean.
    inter = jnp.sum(inter_out, axis=(1, 3))            # (B, C)
    union = jnp.sum(union_out, axis=(1, 3))            # (B, C)
    dice = jnp.sum((2.0 * inter) / (union + 1e-16), axis=1) * (1.0 / n_classes)
    return 1.0 - jnp.mean(dice)


def _reference_loss(predictions, targets, n_classes=2):
    # Pure-JAX reference mirroring the PyTorch module, for verification.
    if targets.ndim == 4:
        targets = jnp.squeeze(targets, axis=1)
    sm = jax.nn.softmax(predictions.astype(jnp.float32), axis=1)
    oh = jax.nn.one_hot(targets, n_classes, dtype=sm.dtype)         # (B, H, W, C)
    oh = jnp.transpose(oh, (0, 3, 1, 2))                            # (B, C, H, W)
    inter = jnp.sum(sm * oh, axis=(2, 3))
    union = jnp.sum(sm ** 2 + oh ** 2, axis=(2, 3))
    w = jnp.ones(inter.shape, sm.dtype) / n_classes
    dice = jnp.sum(w * (2.0 * inter) / (union + 1e-16), axis=1)
    return 1.0 - jnp.mean(dice)


if __name__ == "__main__":
    key = jax.random.PRNGKey(0)
    k1, k2 = jax.random.split(key)

    B, C, H, W = 2, 4, 16, 16
    predictions = jax.random.normal(k1, (B, C, H, W), dtype=jnp.float32)
    targets = jax.random.randint(k2, (B, 1, H, W), 0, C, dtype=jnp.int32)

    loss = multilabel_dice_loss(predictions, targets, n_classes=C)
    loss = jax.block_until_ready(loss)

    ref = _reference_loss(predictions, targets, n_classes=C)
    assert jnp.allclose(loss, ref, atol=1e-5, rtol=1e-5), (loss, ref)

    print("KERNEL_OK")
</pallas_src>

<mosaic_0001>
module attributes {stable_mosaic.version = 11 : i64} {
  func.func @_dice_kernel(%arg0: i32, %arg1: i32, %arg2: i32, %arg3: memref<1x4x2x128xf32, #tpu.memory_space<vmem>>, %arg4: memref<1x2x128xi32, #tpu.memory_space<vmem>>, %arg5: memref<1x1x4x128xf32, #tpu.memory_space<vmem>>, %arg6: memref<1x1x4x128xf32, #tpu.memory_space<vmem>>) attributes {dimension_semantics = [#tpu.dimension_semantics<parallel>, #tpu.dimension_semantics<parallel>, #tpu.dimension_semantics<arbitrary>], iteration_bounds = array<i64: 2, 1, 1>, scalar_prefetch = 0 : i64, scratch_operands = 0 : i64, tpu.core_type = #tpu.core_type<tc>, window_params = [{transform_indices = @transform_0, window_bounds = array<i64: 1, 4, 2, 128>}, {transform_indices = @transform_1, window_bounds = array<i64: 1, 2, 128>}, {transform_indices = @transform_2, window_bounds = array<i64: 1, 1, 4, 128>}, {transform_indices = @transform_3, window_bounds = array<i64: 1, 1, 4, 128>}]} {
    %c0_i32 = arith.constant 0 : i32
    %0 = arith.cmpi eq, %arg2, %c0_i32 : i32
    %1 = arith.extui %0 : i1 to i32
    %c0_i32_0 = arith.constant 0 : i32
    %2 = arith.cmpi ne, %1, %c0_i32_0 : i32
    scf.if %2 {
      %cst_28 = arith.constant 0.000000e+00 : f32
      %53 = vector.broadcast %cst_28 : f32 to vector<1x1x4x128xf32>
      %c0_29 = arith.constant 0 : index
      %c0_30 = arith.constant 0 : index
      %c0_31 = arith.constant 0 : index
      %c0_32 = arith.constant 0 : index
      %54 = vector.load %arg5[%c0_29, %c0_30, %c0_31, %c0_32] : memref<1x1x4x128xf32, #tpu.memory_space<vmem>>, vector<1x1x4x128xf32>
      tpu.vector_store %arg5[%c0_29, %c0_30, %c0_31, %c0_32], %53 {strides = array<i32>} : memref<1x1x4x128xf32, #tpu.memory_space<vmem>>, vector<1x1x4x128xf32>,
      %cst_33 = arith.constant 0.000000e+00 : f32
      %55 = vector.broadcast %cst_33 : f32 to vector<1x1x4x128xf32>
      %c0_34 = arith.constant 0 : index
      %c0_35 = arith.constant 0 : index
      %c0_36 = arith.constant 0 : index
      %c0_37 = arith.constant 0 : index
      %56 = vector.load %arg6[%c0_34, %c0_35, %c0_36, %c0_37] : memref<1x1x4x128xf32, #tpu.memory_space<vmem>>, vector<1x1x4x128xf32>
      tpu.vector_store %arg6[%c0_34, %c0_35, %c0_36, %c0_37], %55 {strides = array<i32>} : memref<1x1x4x128xf32, #tpu.memory_space<vmem>>, vector<1x1x4x128xf32>,
    } else {
    }
    %c0 = arith.constant 0 : index
    %c0_1 = arith.constant 0 : index
    %c0_2 = arith.constant 0 : index
    %c0_3 = arith.constant 0 : index
    %3 = vector.load %arg3[%c0, %c0_1, %c0_2, %c0_3] : memref<1x4x2x128xf32, #tpu.memory_space<vmem>>, vector<1x4x2x128xf32>
    %4 = vector.shape_cast %3 : vector<1x4x2x128xf32> to vector<4x2x128xf32>
    %c0_4 = arith.constant 0 : index
    %c0_5 = arith.constant 0 : index
    %c0_6 = arith.constant 0 : index
    %5 = vector.load %arg4[%c0_4, %c0_5, %c0_6] : memref<1x2x128xi32, #tpu.memory_space<vmem>>, vector<1x2x128xi32>
    %6 = vector.shape_cast %5 : vector<1x2x128xi32> to vector<2x128xi32>
    %cst = arith.constant dense<0xFF800000> : vector<2x128xf32>
    %7 = vector.multi_reduction <maximumf>, %4, %cst [0] : vector<4x2x128xf32> to vector<2x128xf32>
    %8 = vector.shape_cast %7 : vector<2x128xf32> to vector<1x2x128xf32>
    %9 = vector.broadcast %8 : vector<1x2x128xf32> to vector<4x2x128xf32>
    %10 = arith.subf %4, %9 : vector<4x2x128xf32>
    %11 = math.exp %10 : vector<4x2x128xf32>
    %cst_7 = arith.constant dense<0.000000e+00> : vector<2x128xf32>
    %12 = vector.multi_reduction <add>, %11, %cst_7 [0] : vector<4x2x128xf32> to vector<2x128xf32>
    %13 = vector.shape_cast %12 : vector<2x128xf32> to vector<1x2x128xf32>
    %14 = tpu.reciprocal %13 {approx = true} : vector<1x2x128xf32> -> vector<1x2x128xf32>
    %15 = arith.mulf %13, %14 : vector<1x2x128xf32>
    %cst_8 = arith.constant 2.000000e+00 : f32
    %16 = vector.broadcast %cst_8 : f32 to vector<1x2x128xf32>
    %17 = arith.subf %16, %15 : vector<1x2x128xf32>
    %18 = arith.mulf %14, %17 : vector<1x2x128xf32>
    %19 = vector.broadcast %18 : vector<1x2x128xf32> to vector<4x2x128xf32>
    %20 = arith.mulf %11, %19 : vector<4x2x128xf32>
    %c0_i32_9 = arith.constant 0 : i32
    %21 = vector.broadcast %c0_i32_9 : i32 to vector<2x128xi32>
    %22 = arith.cmpi eq, %6, %21 : vector<2x128xi32>
    %c1_i32 = arith.constant 1 : i32
    %23 = vector.broadcast %c1_i32 : i32 to vector<2x128xi32>
    %24 = arith.cmpi eq, %6, %23 : vector<2x128xi32>
    %c2_i32 = arith.constant 2 : i32
    %25 = vector.broadcast %c2_i32 : i32 to vector<2x128xi32>
    %26 = arith.cmpi eq, %6, %25 : vector<2x128xi32>
    %c3_i32 = arith.constant 3 : i32
    %27 = vector.broadcast %c3_i32 : i32 to vector<2x128xi32>
    %28 = arith.cmpi eq, %6, %27 : vector<2x128xi32>
    %29 = vector.shape_cast %22 : vector<2x128xi1> to vector<1x2x128xi1>
    %30 = vector.shape_cast %24 : vector<2x128xi1> to vector<1x2x128xi1>
    %31 = vector.shape_cast %26 : vector<2x128xi1> to vector<1x2x128xi1>
    %32 = vector.shape_cast %28 : vector<2x128xi1> to vector<1x2x128xi1>
    %33 = tpu.concatenate %29, %30, %31, %32 in 0 : vector<1x2x128xi1>, vector<1x2x128xi1>, vector<1x2x128xi1>, vector<1x2x128xi1> -> vector<4x2x128xi1>
    %34 = arith.extui %33 : vector<4x2x128xi1> to vector<4x2x128xi32>
    %35 = arith.sitofp %34 : vector<4x2x128xi32> to vector<4x2x128xf32>
    %36 = arith.mulf %20, %35 : vector<4x2x128xf32>
    %cst_10 = arith.constant dense<0.000000e+00> : vector<4x128xf32>
    %37 = vector.multi_reduction <add>, %36, %cst_10 [1] : vector<4x2x128xf32> to vector<4x128xf32>
    %38 = arith.mulf %20, %20 : vector<4x2x128xf32>
    %39 = arith.addf %38, %35 : vector<4x2x128xf32>
    %cst_11 = arith.constant dense<0.000000e+00> : vector<4x128xf32>
    %40 = vector.multi_reduction <add>, %39, %cst_11 [1] : vector<4x2x128xf32> to vector<4x128xf32>
    %c0_12 = arith.constant 0 : index
    %c0_13 = arith.constant 0 : index
    %c0_14 = arith.constant 0 : index
    %c0_15 = arith.constant 0 : index
    %41 = vector.load %arg5[%c0_12, %c0_13, %c0_14, %c0_15] : memref<1x1x4x128xf32, #tpu.memory_space<vmem>>, vector<1x1x4x128xf32>
    %42 = vector.shape_cast %41 : vector<1x1x4x128xf32> to vector<4x128xf32>
    %43 = arith.addf %42, %37 : vector<4x128xf32>
    %c0_16 = arith.constant 0 : index
    %c0_17 = arith.constant 0 : index
    %c0_18 = arith.constant 0 : index
    %c0_19 = arith.constant 0 : index
    %44 = vector.load %arg5[%c0_16, %c0_17, %c0_18, %c0_19] : memref<1x1x4x128xf32, #tpu.memory_space<vmem>>, vector<1x1x4x128xf32>
    %45 = vector.shape_cast %44 : vector<1x1x4x128xf32> to vector<4x128xf32>
    %46 = vector.shape_cast %43 : vector<4x128xf32> to vector<1x1x4x128xf32>
    tpu.vector_store %arg5[%c0_16, %c0_17, %c0_18, %c0_19], %46 {strides = array<i32>} : memref<1x1x4x128xf32, #tpu.memory_space<vmem>>, vector<1x1x4x128xf32>,
    %c0_20 = arith.constant 0 : index
    %c0_21 = arith.constant 0 : index
    %c0_22 = arith.constant 0 : index
    %c0_23 = arith.constant 0 : index
    %47 = vector.load %arg6[%c0_20, %c0_21, %c0_22, %c0_23] : memref<1x1x4x128xf32, #tpu.memory_space<vmem>>, vector<1x1x4x128xf32>
    %48 = vector.shape_cast %47 : vector<1x1x4x128xf32> to vector<4x128xf32>
    %49 = arith.addf %48, %40 : vector<4x128xf32>
    %c0_24 = arith.constant 0 : index
    %c0_25 = arith.constant 0 : index
    %c0_26 = arith.constant 0 : index
    %c0_27 = arith.constant 0 : index
    %50 = vector.load %arg6[%c0_24, %c0_25, %c0_26, %c0_27] : memref<1x1x4x128xf32, #tpu.memory_space<vmem>>, vector<1x1x4x128xf32>
    %51 = vector.shape_cast %50 : vector<1x1x4x128xf32> to vector<4x128xf32>
    %52 = vector.shape_cast %49 : vector<4x128xf32> to vector<1x1x4x128xf32>
    tpu.vector_store %arg6[%c0_24, %c0_25, %c0_26, %c0_27], %52 {strides = array<i32>} : memref<1x1x4x128xf32, #tpu.memory_space<vmem>>, vector<1x1x4x128xf32>,
    return
  }
  func.func @transform_0(%arg0: i32, %arg1: i32, %arg2: i32) -> (i32, i32, i32, i32) {
    %c1_i32 = arith.constant 1 : i32
    %0 = arith.muli %arg1, %c1_i32 : i32
    %1 = arith.addi %0, %arg2 : i32
    %c0_i32 = arith.constant 0 : i32
    %c0_i32_0 = arith.constant 0 : i32
    %c0_i32_1 = arith.constant 0 : i32
    return %arg0, %c0_i32, %1, %c0_i32_0 : i32, i32, i32, i32
  }
  func.func @transform_1(%arg0: i32, %arg1: i32, %arg2: i32) -> (i32, i32, i32) {
    %c1_i32 = arith.constant 1 : i32
    %0 = arith.muli %arg1, %c1_i32 : i32
    %1 = arith.addi %0, %arg2 : i32
    %c0_i32 = arith.constant 0 : i32
    %c0_i32_0 = arith.constant 0 : i32
    return %arg0, %1, %c0_i32 : i32, i32, i32
  }
  func.func @transform_2(%arg0: i32, %arg1: i32, %arg2: i32) -> (i32, i32, i32, i32) {
    %c0_i32 = arith.constant 0 : i32
    %c0_i32_0 = arith.constant 0 : i32
    %c0_i32_1 = arith.constant 0 : i32
    return %arg0, %arg1, %c0_i32, %c0_i32_0 : i32, i32, i32, i32
  }
  func.func @transform_3(%arg0: i32, %arg1: i32, %arg2: i32) -> (i32, i32, i32, i32) {
    %c0_i32 = arith.constant 0 : i32
    %c0_i32_0 = arith.constant 0 : i32
    %c0_i32_1 = arith.constant 0 : i32
    return %arg0, %arg1, %c0_i32, %c0_i32_0 : i32, i32, i32, i32
  }
}

</mosaic_0001>

<llo_original>
// kernel: tpu_custom_call.1
$region0: #{tpu_custom_call.1}
  #allocation0 [shape = 'u32[]', space=smem, size = 0x4, offset = 0x4, fixed_abs, tag = 'smem constant byte address 0x4 - core index']
  #allocation1 [shape = 'u32[144,128]{1,0:T(1,128)}', space=vmem, size = 0x12000, scoped, tag = 'internal scratch']
  %s0 = inlined_call_operand.hbm [shape: f32[2,4,2,128], index: 0, kind: input, shape index: {}]
  %s1 = inlined_call_operand.hbm [shape: s32[2,2,128], index: 1, kind: input, shape index: {}]
  %s2 = inlined_call_operand.hbm [shape: f32[2,1,4,128], index: 2, kind: output, shape index: {0}]
  %s3 = inlined_call_operand.hbm [shape: f32[2,1,4,128], index: 3, kind: output, shape index: {1}]
  %4 = xla_tuple %s2, %s3
  %s5 = sld [smem:[#allocation0]]
  $region61: #{tpu_custom_call.1} parent=0
    _
  %s7 = ssub.s32 1, %s5
  %s8 = scalar_select 0, %s7, %s5
  $region1: #{tpu_custom_call.1} parent=0
    #allocation2 [shape = 'u8[8192]{0}', space=vmem, size = 0x2000, scoped, tag = 'input window, operand 0']
    #allocation3 [shape = 's32[2]{0}', space=sflag, size = 0x8, scoped, tag = 'scoped memory for tpu_custom_call.1']
    #allocation4 [shape = 's32[2]{0}', space=sflag, size = 0x8, scoped, tag = 'scoped memory for tpu_custom_call.1']
    #allocation5 [shape = 'u8[2048]{0}', space=vmem, size = 0x800, scoped, tag = 'input window, operand 1']
    #allocation6 [shape = 's32[2]{0}', space=sflag, size = 0x8, scoped, tag = 'scoped memory for tpu_custom_call.1']
    #allocation7 [shape = 'u8[4096]{0}', space=vmem, size = 0x1000, scoped, tag = 'output window, operand 0']
    #allocation8 [shape = 'u8[4096]{0}', space=vmem, size = 0x1000, scoped, tag = 'output window, operand 1']
    #allocation9 [shape = 's32[2]{0}', space=sflag, size = 0x8, scoped, tag = 'scoped memory for tpu_custom_call.1']
    %9 = vsyncpa [#allocation3], 0
    %s10 = scalar_lea.sflag [#allocation3], 1
    %11 = vsyncpa %s10, 0
    %12 = vsyncpa [#allocation6], 0
    %s13 = scalar_lea.sflag [#allocation6], 1
    %14 = vsyncpa %s13, 0
    %15 = vsyncpa [#allocation4], 0
    %s16 = scalar_lea.sflag [#allocation4], 1
    %17 = vsyncpa %s16, 0
    %18 = vsyncpa [#allocation9], 0
    %s19 = scalar_lea.sflag [#allocation9], 1
    %20 = vsyncpa %s19, 0
    loop: start=0, step=1, limit=4
    $region2: #{tpu_custom_call.1} parent=1 // loop_pre_header
      _
    $region3: #{tpu_custom_call.1} parent=1 // loop_header
      %s22 = sphi 0, %s26
      %p23 = scmp.ge.s32.totalorder %s22, 4
      %s29 = sphi 0, %s48
      %s30 = sphi 0, %s44
      %s31 = sphi 0, %s40
      %s32 = sphi 0, %s29
      %s33 = sphi 0, %s30
      %s34 = sphi 0, %s31
      %s35 = sphi 0, %s32
      %s36 = sphi 0, %s33
      %s37 = sphi 0, %s34
      %s55 = sphi 0, %s57
      %s58 = sphi 0, %s55
      %s59 = sphi 0, %s58
      %s75 = sphi 0, %s59
      %s85 = sphi 0, %s87
      %s88 = sphi 0, %s85
      %s89 = sphi 0, %s88
      %s105 = sphi 0, %s89
      %s113 = sphi 0, %s115
      %s116 = sphi 0, %s113
      %s117 = sphi 0, %s116
      %s133 = sphi 0, %s117
      %s141 = sphi 0, %s143
      %s144 = sphi 0, %s141
      %s145 = sphi 0, %s144
      %s161 = sphi 0, %s145
    $region4: #{tpu_custom_call.1} parent=1 // loop_header_branch
      %25 = sbr.rel (%p23) target = $region8
    $region5: #{tpu_custom_call.1} parent=1 // loop_body
      %s27 = ssub.s32 %s22, 1
      %s28 = ssub.s32 %s22, 2
      %s38 = sadd.s32 1, %s31
      %p39 = scmp.ge.s32.totalorder %s38, 1
      %s40 = scalar_select %p39, 0, %s38
      %s41 = sadd.s32 1, %s30
      %s42 = scalar_select %p39, %s41, %s30
      %p43 = scmp.ge.s32.totalorder %s42, 1
      %s44 = scalar_select %p43, 0, %s42
      %s45 = sadd.s32 1, %s29
      %s46 = scalar_select %p43, %s45, %s29
      %p47 = scmp.ge.s32.totalorder %s46, 2
      %s48 = scalar_select %p47, 0, %s46
      %s49 = sadd.s32 %s30, %s31
      %s50 = sadd.s32 %s44, %s40
      %s51 = ssub.s32 %s29, %s48
      %s52 = ssub.s32 %s49, %s50
      %s53 = sor.u32 %s51, %s52
      %p54 = scmp.eq.s32.totalorder %s53, 0
      %s56 = sadd.s32 %s55, 1
      %s57 = scalar_select %p54, %s55, %s56
      %p60 = pneg %p54
      %p61 = scmp.eq.s32.totalorder %s22, 1
      %p62 = por %p60, %p61
      %p63 = scmp.ne.s32.totalorder %s55, %s58
      %p64 = scmp.eq.s32.totalorder %s22, 0
      %p65 = por %p63, %p64
      %p66 = scmp.ne.s32.totalorder %s55, %s58
      %p67 = scmp.eq.s32.totalorder %s27, 1
      %p68 = por %p66, %p67
      %p69 = scmp.ne.s32.totalorder %s58, %s59
      %p70 = scmp.eq.s32.totalorder %s27, 0
      %p71 = por %p69, %p70
      %p72 = scmp.ne.s32.totalorder %s58, %s59
      %p73 = scmp.eq.s32.totalorder %s28, 1
      %p74 = por %p72, %p73
      %p76 = scmp.ne.s32.totalorder %s59, %s75
      %p77 = scmp.eq.s32.totalorder %s28, 0
      %p78 = por %p76, %p77
      %s79 = sadd.s32 %s30, %s31
      %s80 = sadd.s32 %s44, %s40
      %s81 = ssub.s32 %s29, %s48
      %s82 = ssub.s32 %s79, %s80
      %s83 = sor.u32 %s81, %s82
      %p84 = scmp.eq.s32.totalorder %s83, 0
      %s86 = sadd.s32 %s85, 1
      %s87 = scalar_select %p84, %s85, %s86
      %p90 = pneg %p84
      %p91 = scmp.eq.s32.totalorder %s22, 1
      %p92 = por %p90, %p91
      %p93 = scmp.ne.s32.totalorder %s85, %s88
      %p94 = scmp.eq.s32.totalorder %s22, 0
      %p95 = por %p93, %p94
      %p96 = scmp.ne.s32.totalorder %s85, %s88
      %p97 = scmp.eq.s32.totalorder %s27, 1
      %p98 = por %p96, %p97
      %p99 = scmp.ne.s32.totalorder %s88, %s89
      %p100 = scmp.eq.s32.totalorder %s27, 0
      %p101 = por %p99, %p100
      %p102 = scmp.ne.s32.totalorder %s88, %s89
      %p103 = scmp.eq.s32.totalorder %s28, 1
      %p104 = por %p102, %p103
      %p106 = scmp.ne.s32.totalorder %s89, %s105
      %p107 = scmp.eq.s32.totalorder %s28, 0
      %p108 = por %p106, %p107
      %s109 = ssub.s32 %s29, %s48
      %s110 = ssub.s32 %s30, %s44
      %s111 = sor.u32 %s109, %s110
      %p112 = scmp.eq.s32.totalorder %s111, 0
      %s114 = sadd.s32 %s113, 1
      %s115 = scalar_select %p112, %s113, %s114
      %p118 = pneg %p112
      %p119 = scmp.eq.s32.totalorder %s22, 1
      %p120 = por %p118, %p119
      %p121 = scmp.ne.s32.totalorder %s113, %s116
      %p122 = scmp.eq.s32.totalorder %s22, 0
      %p123 = por %p121, %p122
      %p124 = scmp.ne.s32.totalorder %s113, %s116
      %p125 = scmp.eq.s32.totalorder %s27, 1
      %p126 = por %p124, %p125
      %p127 = scmp.ne.s32.totalorder %s116, %s117
      %p128 = scmp.eq.s32.totalorder %s27, 0
      %p129 = por %p127, %p128
      %p130 = scmp.ne.s32.totalorder %s116, %s117
      %p131 = scmp.eq.s32.totalorder %s28, 1
      %p132 = por %p130, %p131
      %p134 = scmp.ne.s32.totalorder %s117, %s133
      %p135 = scmp.eq.s32.totalorder %s28, 0
      %p136 = por %p134, %p135
      %s137 = ssub.s32 %s29, %s48
      %s138 = ssub.s32 %s30, %s44
      %s139 = sor.u32 %s137, %s138
      %p140 = scmp.eq.s32.totalorder %s139, 0
      %s142 = sadd.s32 %s141, 1
      %s143 = scalar_select %p140, %s141, %s142
      %p146 = pneg %p140
      %p147 = scmp.eq.s32.totalorder %s22, 1
      %p148 = por %p146, %p147
      %p149 = scmp.ne.s32.totalorder %s141, %s144
      %p150 = scmp.eq.s32.totalorder %s22, 0
      %p151 = por %p149, %p150
      %p152 = scmp.ne.s32.totalorder %s141, %s144
      %p153 = scmp.eq.s32.totalorder %s27, 1
      %p154 = por %p152, %p153
      %p155 = scmp.ne.s32.totalorder %s144, %s145
      %p156 = scmp.eq.s32.totalorder %s27, 0
      %p157 = por %p155, %p156
      %p158 = scmp.ne.s32.totalorder %s144, %s145
      %p159 = scmp.eq.s32.totalorder %s28, 1
      %p160 = por %p158, %p159
      %p162 = scmp.ne.s32.totalorder %s145, %s161
      %p163 = scmp.eq.s32.totalorder %s28, 0
      %p164 = por %p162, %p163
      %p165 = scmp.le.s32.totalorder 1, %s22
      %p166 = scmp.lt.s32.totalorder %s22, 3
      %p167 = pnand %p165, %p166
      %p168 = pneg %p167
      // Predicated region
      $region9: #{tpu_custom_call.1} parent=5 // pred_check
        _
      $region10: #{tpu_custom_call.1} parent=5 // pred_check_branch
        %170 = sbr.rel (%p167) target = $region12
      $region11: #{tpu_custom_call.1} parent=5 // pred_region
        %s171 = ssub.s32 %s22, 1
      $region12: #{tpu_custom_call.1} parent=5 // pred_fallthru
        _
      %p172 = scmp.lt.s32.totalorder %s22, 2
      // Predicated region
      $region13: #{tpu_custom_call.1} parent=5 // pred_check
        %p173 = pneg %p172
      $region14: #{tpu_custom_call.1} parent=5 // pred_check_branch
        %175 = sbr.rel (%p173) target = $region16
      $region15: #{tpu_custom_call.1} parent=5 // pred_region
        // Predicated region
        $region17: #{tpu_custom_call.1} parent=15 // pred_check
          %p176 = pneg %p65
        $region18: #{tpu_custom_call.1} parent=15 // pred_check_branch
          %178 = sbr.rel (%p176) target = $region20
        $region19: #{tpu_custom_call.1} parent=15 // pred_region
          %s179 = sand.u32 %s55, 1
          %s180 = scalar_lea.sflag [#allocation3], %s179
          %s181 = sand.u32 %s55, 1
          %s182 = smul.addr %s181, 8
          %s183 = scalar_lea.vmem [#allocation2], %s182
          %s184 = sadd.s32 %s30, %s31
          %s186 = ssub.s32 128, 128
          %187 = vsyncadd %s180, %s186
          %s188 = smul.addr %s29, 4
          %s189 = sadd.s32 %s184, %s188
          %s190 = smul.addr %s189, 32
          %s191 = scalar_lea.hbm %s0, %s190
          %s192 = sshll.u32 %s183, 4
          %s193 = int_to_ptr.vmem [resolvable:$true] %s192
          %198 = dma.hbm_to_vmem [thread:$0]  %s191, 128, %s193, %s180, 32, 32, 2
        $region20: #{tpu_custom_call.1} parent=15 // pred_fallthru
          _
        // Predicated region
        $region21: #{tpu_custom_call.1} parent=15 // pred_check
          %p199 = pneg %p95
        $region22: #{tpu_custom_call.1} parent=15 // pred_check_branch
          %201 = sbr.rel (%p199) target = $region24
        $region23: #{tpu_custom_call.1} parent=15 // pred_region
          %s202 = sand.u32 %s85, 1
          %s203 = scalar_lea.sflag [#allocation6], %s202
          %s204 = sand.u32 %s85, 1
          %s205 = smul.addr %s204, 2
          %s206 = scalar_lea.vmem [#allocation5], %s205
          %s207 = sadd.s32 %s30, %s31
          %s209 = ssub.s32 32, 32
          %210 = vsyncadd %s203, %s209
          %s211 = sadd.s32 %s207, %s29
          %s212 = smul.addr %s211, 32
          %s213 = scalar_lea.hbm %s1, %s212
          %s215 = sshll.u32 %s206, 4
          %s216 = int_to_ptr.vmem [resolvable:$true] %s215
          %218 = dma.hbm_to_vmem [thread:$0]  %s213, 32, %s216, %s203
        $region24: #{tpu_custom_call.1} parent=15 // pred_fallthru
          _
      $region16: #{tpu_custom_call.1} parent=5 // pred_fallthru
        _
      %p219 = scmp.le.s32.totalorder 1, %s22
      %p220 = scmp.lt.s32.totalorder %s22, 3
      %p221 = pnand %p219, %p220
      %p222 = pneg %p221
      // Predicated region
      $region25: #{tpu_custom_call.1} parent=5 // pred_check
        _
      $region26: #{tpu_custom_call.1} parent=5 // pred_check_branch
        %224 = sbr.rel (%p221) target = $region28
      $region27: #{tpu_custom_call.1} parent=5 // pred_region
        %s225 = ssub.s32 %s22, 1
        %s226 = sand.u32 %s58, 1
        %s227 = scalar_lea.sflag [#allocation3], %s226
        %s228 = sand.u32 %s58, 1
        %s229 = smul.addr %s228, 8
        %s230 = scalar_lea.vmem [#allocation2], %s229
        // Predicated region
        $region29: #{tpu_custom_call.1} parent=27 // pred_check
          %p231 = pneg %p71
        $region30: #{tpu_custom_call.1} parent=27 // pred_check_branch
          %233 = sbr.rel (%p231) target = $region32
        $region31: #{tpu_custom_call.1} parent=27 // pred_region
          %234 = dma.done %s227, 128
        $region32: #{tpu_custom_call.1} parent=27 // pred_fallthru
          _
        %s235 = sand.u32 %s88, 1
        %s236 = scalar_lea.sflag [#allocation6], %s235
        %s237 = sand.u32 %s88, 1
        %s238 = smul.addr %s237, 2
        %s239 = scalar_lea.vmem [#allocation5], %s238
        // Predicated region
        $region33: #{tpu_custom_call.1} parent=27 // pred_check
          %p240 = pneg %p101
        $region34: #{tpu_custom_call.1} parent=27 // pred_check_branch
          %242 = sbr.rel (%p240) target = $region36
        $region35: #{tpu_custom_call.1} parent=27 // pred_region
          %243 = dma.done %s236, 32
        $region36: #{tpu_custom_call.1} parent=27 // pred_fallthru
          _
        %s244 = sand.u32 %s58, 1
        %s245 = scalar_lea.sflag [#allocation3], %s244
        %s246 = sand.u32 %s58, 1
        %s247 = smul.addr %s246, 8
        %s248 = scalar_lea.vmem [#allocation2], %s247
        %p249 = pneg %p71
        %p250 = pneg %p68
        %s251 = sand.u32 %s88, 1
        %s252 = scalar_lea.sflag [#allocation6], %s251
        %s253 = sand.u32 %s88, 1
        %s254 = smul.addr %s253, 2
        %s255 = scalar_lea.vmem [#allocation5], %s254
        %p256 = pneg %p101
        %p257 = pneg %p98
        %p258 = pneg %p129
        %p259 = pneg %p126
        %s260 = sand.u32 %s116, 1
        %s261 = scalar_lea.sflag [#allocation4], %s260
        %s262 = sand.u32 %s116, 1
        %s263 = smul.addr %s262, 4
        %s264 = scalar_lea.vmem [#allocation7], %s263
        %p265 = pneg %p157
        %p266 = pneg %p154
        %s267 = sand.u32 %s144, 1
        %s268 = scalar_lea.sflag [#allocation9], %s267
        %s269 = sand.u32 %s144, 1
        %s270 = smul.addr %s269, 4
        %s271 = scalar_lea.vmem [#allocation8], %s270
        %s272 = sadd.s32 %s33, %s34
        %s273 = sadd.s32 %s33, %s34
        %p274 = scmp.eq.s32.totalorder %s34, 0
        // Predicated region
        $region37: #{tpu_custom_call.1} parent=27 // pred_check
          %p275 = pneg %p274
        $region38: #{tpu_custom_call.1} parent=27 // pred_check_branch
          %277 = sbr.rel (%p275) target = $region40
        $region39: #{tpu_custom_call.1} parent=27 // pred_region
          %278 = vst [vmem:[%s264] sm:$0xf] 0.0
          %279 = vst [vmem:[%s271] sm:$0xf] 0.0
        $region40: #{tpu_custom_call.1} parent=27 // pred_fallthru
          _
        %v280 = vld [vmem:[%s230] sm:$0x3]
        %v281 = vld [vmem:[%s230 + $0x2] sm:$0x3]
        %v282 = vld [vmem:[%s230 + $0x4] sm:$0x3]
        %v283 = vld [vmem:[%s230 + $0x6] sm:$0x3]
        %v284 = vld [vmem:[%s239] sm:$0x3]
        %vm285 = vcmask 1041408
        %v286 = vsel %vm285, %v280, -inf
        %v287 = vsel %vm285, %v281, -inf
        %v288 = vsel %vm285, %v282, -inf
        %v289 = vsel %vm285, %v283, -inf
        %v290 = vmax.f32 %v286, %v287
        %v291 = vmax.f32 %v288, %v289
        %v292 = vmax.f32 %v290, %v291
        %v293 = vsub.f32 %v280, %v292
        %v294 = vsub.f32 %v281, %v292
        %v295 = vsub.f32 %v282, %v292
        %v296 = vsub.f32 %v283, %v292
        %v297 = vmul.f32 %v293, 1.442695
        %v298 = vpow.pop %v297
        %v299 = vmul.f32 %v294, 1.442695
        %v300 = vpow.pop %v299
        %v301 = vmul.f32 %v295, 1.442695
        %v302 = vpow.pop %v301
        %v303 = vmul.f32 %v296, 1.442695
        %v304 = vpow.pop %v303
        %v305 = vsel %vm285, %v298, 0.0
        %v306 = vsel %vm285, %v300, 0.0
        %v307 = vadd.f32 %v305, %v306
        %v308 = vsel %vm285, %v302, 0.0
        %v309 = vadd.f32 %v307, %v308
        %v310 = vsel %vm285, %v304, 0.0
        %v311 = vadd.f32 %v309, %v310
        %v312 = vrcp.pop %v311
        %v313 = vmul.f32 %v311, %v312
        %v314 = vsub.f32 2.0, %v313
        %v315 = vmul.f32 %v312, %v314
        %v316 = vmul.f32 %v298, %v315
        %v317 = vmul.f32 %v300, %v315
        %v318 = vmul.f32 %v302, %v315
        %v319 = vmul.f32 %v304, %v315
        %vm320 = vcmp.eq.s32.totalorder %v284, 0
        %vm321 = vcmp.eq.s32.totalorder %v284, 1
        %vm322 = vcmp.eq.s32.totalorder %v284, 2
        %vm323 = vcmp.eq.s32.totalorder %v284, 3
        %v324 = vsel %vm320, 1, 0
        %v325 = vsel %vm321, 1, 0
        %v326 = vsel %vm322, 1, 0
        %v327 = vsel %vm323, 1, 0
        %v328 = vcvt.s32.f32 %v324
        %v329 = vcvt.s32.f32 %v325
        %v330 = vcvt.s32.f32 %v326
        %v331 = vcvt.s32.f32 %v327
        %v332 = vmul.f32 %v316, %v328
        %v333 = vmul.f32 %v317, %v329
        %v334 = vmul.f32 %v318, %v330
        %v335 = vmul.f32 %v319, %v331
        %v336 = vsel %vm285, %v332, 0.0
        %v337 = vrot.slane %v336, 4
        %v338 = vadd.f32 %v336, %v337
        %v339 = vrot.slane %v338, 2
        %v340 = vadd.f32 %v338, %v339
        %v341 = vrot.slane %v340, 1
        %v342 = vadd.f32 %v340, %v341
        %v343 = vsel %vm285, %v333, 0.0
        %v344 = vrot.slane %v343, 4
        %v345 = vadd.f32 %v343, %v344
        %v346 = vrot.slane %v345, 2
        %v347 = vadd.f32 %v345, %v346
        %v348 = vrot.slane %v347, 1
        %v349 = vadd.f32 %v347, %v348
        %v350 = vsel %vm285, %v334, 0.0
        %v351 = vrot.slane %v350, 4
        %v352 = vadd.f32 %v350, %v351
        %v353 = vrot.slane %v352, 2
        %v354 = vadd.f32 %v352, %v353
        %v355 = vrot.slane %v354, 1
        %v356 = vadd.f32 %v354, %v355
        %v357 = vsel %vm285, %v335, 0.0
        %v358 = vrot.slane %v357, 4
        %v359 = vadd.f32 %v357, %v358
        %v360 = vrot.slane %v359, 2
        %v361 = vadd.f32 %v359, %v360
        %v362 = vrot.slane %v361, 1
        %v363 = vadd.f32 %v361, %v362
        %v364 = vmul.f32 %v316, %v316
        %v365 = vmul.f32 %v317, %v317
        %v366 = vmul.f32 %v318, %v318
        %v367 = vmul.f32 %v319, %v319
        %v368 = vadd.f32 %v364, %v328
        %v369 = vadd.f32 %v365, %v329
        %v370 = vadd.f32 %v366, %v330
        %v371 = vadd.f32 %v367, %v331
        %v372 = vsel %vm285, %v368, 0.0
        %v373 = vrot.slane %v372, 4
        %v374 = vadd.f32 %v372, %v373
        %v375 = vrot.slane %v374, 2
        %v376 = vadd.f32 %v374, %v375
        %v377 = vrot.slane %v376, 1
        %v378 = vadd.f32 %v376, %v377
        %v379 = vsel %vm285, %v369, 0.0
        %v380 = vrot.slane %v379, 4
        %v381 = vadd.f32 %v379, %v380
        %v382 = vrot.slane %v381, 2
        %v383 = vadd.f32 %v381, %v382
        %v384 = vrot.slane %v383, 1
        %v385 = vadd.f32 %v383, %v384
        %v386 = vsel %vm285, %v370, 0.0
        %v387 = vrot.slane %v386, 4
        %v388 = vadd.f32 %v386, %v387
        %v389 = vrot.slane %v388, 2
        %v390 = vadd.f32 %v388, %v389
        %v391 = vrot.slane %v390, 1
        %v392 = vadd.f32 %v390, %v391
        %v393 = vsel %vm285, %v371, 0.0
        %v394 = vrot.slane %v393, 4
        %v395 = vadd.f32 %v393, %v394
        %v396 = vrot.slane %v395, 2
        %v397 = vadd.f32 %v395, %v396
        %v398 = vrot.slane %v397, 1
        %v399 = vadd.f32 %v397, %v398
        %v400 = vld [vmem:[%s264] sm:$0xf]
        %vm405 = vcmask 1041409
        %v406 = vsel %vm405, %v349, %v342
        %vm407 = vcmask 1042434
        %v408 = vsel %vm407, %v356, %v406
        %vm409 = vcmask 1043459
        %v410 = vsel %vm409, %v363, %v408
        %v412 = vadd.f32 %v400, %v410
        %413 = vst [vmem:[%s264] sm:$0xf] %v412
        %v414 = vld [vmem:[%s271] sm:$0xf]
        %v419 = vsel %vm405, %v385, %v378
        %v420 = vsel %vm407, %v392, %v419
        %v421 = vsel %vm409, %v399, %v420
        %v423 = vadd.f32 %v414, %v421
        %424 = vst [vmem:[%s271] sm:$0xf] %v423
        %s425 = sand.u32 %s116, 1
        %s426 = scalar_lea.sflag [#allocation4], %s425
        %s427 = sand.u32 %s116, 1
        %s428 = smul.addr %s427, 4
        %s429 = scalar_lea.vmem [#allocation7], %s428
        %s430 = sand.u32 %s144, 1
        %s431 = scalar_lea.sflag [#allocation9], %s430
        %s432 = sand.u32 %s144, 1
        %s433 = smul.addr %s432, 4
        %s434 = scalar_lea.vmem [#allocation8], %s433
        // Predicated region
        $region41: #{tpu_custom_call.1} parent=27 // pred_check
          %p435 = pneg %p126
        $region42: #{tpu_custom_call.1} parent=27 // pred_check_branch
          %437 = sbr.rel (%p435) target = $region44
        $region43: #{tpu_custom_call.1} parent=27 // pred_region
          %s439 = ssub.s32 64, 64
          %440 = vsyncadd %s426, %s439
          %s441 = sadd.s32 %s33, %s32
          %s442 = smul.addr %s441, 64
          %s443 = scalar_lea.hbm %s2, %s442
          %s445 = sshll.u32 %s429, 4
          %s446 = int_to_ptr.vmem [resolvable:$true] %s445
          %448 = dma.vmem_to_hbm [thread:$0]  %s446, 64, %s443, %s426
        $region44: #{tpu_custom_call.1} parent=27 // pred_fallthru
          _
        // Predicated region
        $region45: #{tpu_custom_call.1} parent=27 // pred_check
          %p449 = pneg %p154
        $region46: #{tpu_custom_call.1} parent=27 // pred_check_branch
          %451 = sbr.rel (%p449) target = $region48
        $region47: #{tpu_custom_call.1} parent=27 // pred_region
          %s453 = ssub.s32 64, 64
          %454 = vsyncadd %s431, %s453
          %s455 = sadd.s32 %s33, %s32
          %s456 = smul.addr %s455, 64
          %s457 = scalar_lea.hbm %s3, %s456
          %s459 = sshll.u32 %s434, 4
          %s460 = int_to_ptr.vmem [resolvable:$true] %s459
          %462 = dma.vmem_to_hbm [thread:$0]  %s460, 64, %s457, %s431
        $region48: #{tpu_custom_call.1} parent=27 // pred_fallthru
          _
      $region28: #{tpu_custom_call.1} parent=5 // pred_fallthru
        _
      %p463 = scmp.le.s32.totalorder 2, %s22
      // Predicated region
      $region49: #{tpu_custom_call.1} parent=5 // pred_check
        %p464 = pneg %p463
      $region50: #{tpu_custom_call.1} parent=5 // pred_check_branch
        %466 = sbr.rel (%p464) target = $region52
      $region51: #{tpu_custom_call.1} parent=5 // pred_region
        %s467 = ssub.s32 %s22, 2
        // Predicated region
        $region53: #{tpu_custom_call.1} parent=51 // pred_check
          %p468 = pneg %p132
        $region54: #{tpu_custom_call.1} parent=51 // pred_check_branch
          %470 = sbr.rel (%p468) target = $region56
        $region55: #{tpu_custom_call.1} parent=51 // pred_region
          %s471 = sand.u32 %s117, 1
          %s472 = scalar_lea.sflag [#allocation4], %s471
          %s473 = sand.u32 %s117, 1
          %s474 = smul.addr %s473, 4
          %s475 = scalar_lea.vmem [#allocation7], %s474
          %476 = dma.done %s472, 64
        $region56: #{tpu_custom_call.1} parent=51 // pred_fallthru
          _
        // Predicated region
        $region57: #{tpu_custom_call.1} parent=51 // pred_check
          %p477 = pneg %p160
        $region58: #{tpu_custom_call.1} parent=51 // pred_check_branch
          %479 = sbr.rel (%p477) target = $region60
        $region59: #{tpu_custom_call.1} parent=51 // pred_region
          %s480 = sand.u32 %s145, 1
          %s481 = scalar_lea.sflag [#allocation9], %s480
          %s482 = sand.u32 %s145, 1
          %s483 = smul.addr %s482, 4
          %s484 = scalar_lea.vmem [#allocation8], %s483
          %485 = dma.done %s481, 64
        $region60: #{tpu_custom_call.1} parent=51 // pred_fallthru
          _
      $region52: #{tpu_custom_call.1} parent=5 // pred_fallthru
        _
    $region6: #{tpu_custom_call.1} parent=1 // loop_footer
      %s26 = sadd.s32 1, %s22
    $region7: #{tpu_custom_call.1} parent=1 // loop_footer_branch
      %21 = sbr.rel target = $region3
    $region8: #{tpu_custom_call.1} parent=1 // loop_exit
      _
    %486 = vsyncpa [#allocation3], 1
    %s487 = scalar_lea.sflag [#allocation3], 1
    %488 = vsyncpa %s487, 1
    %489 = vsyncpa [#allocation6], 1
    %s490 = scalar_lea.sflag [#allocation6], 1
    %491 = vsyncpa %s490, 1
    %492 = vsyncpa [#allocation4], 1
    %s493 = scalar_lea.sflag [#allocation4], 1
    %494 = vsyncpa %s493, 1
    %495 = vsyncpa [#allocation9], 1
    %s496 = scalar_lea.sflag [#allocation9], 1
    %497 = vsyncpa %s496, 1

</llo_original>
